<compile_context>
chip_gen: v7x
topology: tpu7x:2x2x1
jax: 0.10.0
libtpu: 0.0.40
codegen_flags: <defaults>
</compile_context>

<pallas_src>
import numpy as np
import jax
import jax.numpy as jnp
from jax.experimental import pallas as pl
from jax.experimental.pallas import tpu as pltpu

OUT_SIZES = (4, 5, 7, 11)
_LANES = 128


def _pool_matrix(in_size: int, out_size: int) -> np.ndarray:
    """Rows average the adaptive-pool bins, matching torch AdaptiveAvgPool2d."""
    P = np.zeros((out_size, in_size), dtype=np.float32)
    for i in range(out_size):
        s = (i * in_size) // out_size
        e = -((-(i + 1) * in_size) // out_size)  # ceil((i+1)*in/out)
        P[i, s:e] = 1.0 / float(e - s)
    return P


def _packed_pool_matrix(H: int, W: int):
    """Build (H*W, p_pad) matrix whose column block k is kron(Ph_k, Pw_k)^T.

    With row-major flattening: flatten(Ph @ X @ Pw^T) == kron(Ph, Pw) @ flatten(X),
    so  x2d @ P_t  packs all four pooled outputs along the lane dimension.
    """
    blocks = [np.kron(_pool_matrix(H, k), _pool_matrix(W, k)) for k in OUT_SIZES]
    P_all = np.concatenate(blocks, axis=0)            # (211, H*W)
    n_out = P_all.shape[0]
    p_pad = -(-n_out // _LANES) * _LANES              # round up to 128 lanes -> 256
    P_t = np.zeros((H * W, p_pad), dtype=np.float32)
    P_t[:, :n_out] = P_all.T
    return P_t, n_out, p_pad


def _pick_block_rows(total: int, hw: int, n_out: int, p_pad: int,
                     itemsize: int) -> int:
    """Rows of (n, c) slices per grid step (multiple of 8).

    Budget ~4 MiB of single-buffered (input + output) rows per step; Pallas
    double-buffers both, so the per-step VMEM footprint stays ~8-9 MiB —
    under v5e's 16 MiB scoped-VMEM default and far under v6e/v7x's 32 MiB.
    """
    row_bytes = (hw + n_out) * itemsize
    budget = 4 * 1024 * 1024 - 2 * hw * p_pad * itemsize   # leave room for P
    b = max(8, (max(budget, 8 * row_bytes) // row_bytes // 8) * 8)

    if b >= total:
        if total >= 16:
            # keep >= 2 grid steps so v7x's two TensorCores both get work
            return ((-(-total // 2) + 7) // 8) * 8
        return max(8, ((total + 7) // 8) * 8)

    # bias toward an even number of grid steps (even split across v7x's 2 TCs)
    steps = -(-total // b)
    if steps % 2 == 1:
        steps += 1
        b = max(8, ((-(-total // steps) + 7) // 8) * 8)
    return b


def _avgpools_kernel(x_ref, p_ref, *out_refs):
    # x_ref: (B, H*W), p_ref: (H*W, p_pad); out_refs[k]: (B, k*k)
    packed = jnp.dot(x_ref[...], p_ref[...],
                     preferred_element_type=jnp.float32,
                     precision=jax.lax.Precision.HIGHEST)
    off = 0
    for ref, k in zip(out_refs, OUT_SIZES):
        kk = k * k
        ref[...] = packed[:, off:off + kk].astype(ref.dtype)
        off += kk


def avg_pools(x: jax.Array):
    """x: (N, C, H, W) -> tuple of 4 arrays (N, C, k, k), k in OUT_SIZES."""
    if x.dtype not in (jnp.float32, jnp.bfloat16):
        x = x.astype(jnp.float32)
    N, C, H, W = x.shape
    total = N * C
    hw = H * W
    dtype = x.dtype

    x2d = x.reshape(total, hw)                         # free row-major reshape

    P_t_np, n_out, p_pad = _packed_pool_matrix(H, W)
    P_t = jnp.asarray(P_t_np, dtype=dtype)             # bf16 x -> bf16 P (half the read)

    B = _pick_block_rows(total, hw, n_out, p_pad, x.dtype.itemsize)
    grid = (pl.cdiv(total, B),)                        # ragged last block is masked

    out_shape = tuple(jax.ShapeDtypeStruct((total, k * k), dtype) for k in OUT_SIZES)
    out_specs = tuple(pl.BlockSpec((B, k * k), lambda i: (i, 0)) for k in OUT_SIZES)

    outs = pl.pallas_call(
        _avgpools_kernel,
        out_shape=out_shape,
        grid_spec=pl.GridSpec(
            grid=grid,
            in_specs=[
                pl.BlockSpec((B, hw), lambda i: (i, 0)),      # batched x rows
                pl.BlockSpec((hw, p_pad), lambda i: (0, 0)),  # constant pool matrix
            ],
            out_specs=out_specs,
        ),
        compiler_params=pltpu.CompilerParams(
            dimension_semantics=("parallel",)),
    )(x2d, P_t)

    return tuple(o.reshape(N, C, k, k) for o, k in zip(outs, OUT_SIZES))


def _adaptive_avg_pool_ref(x: jax.Array, k: int) -> jax.Array:
    """Exact f32 windowed-mean reference matching PyTorch AdaptiveAvgPool2d."""
    N, C, H, W = x.shape
    rows = []
    for i in range(k):
        hs = (i * H) // k
        he = -((-(i + 1) * H) // k)
        cols = []
        for j in range(k):
            ws = (j * W) // k
            we = -((-(j + 1) * W) // k)
            cols.append(jnp.mean(x[:, :, hs:he, ws:we], axis=(2, 3)))
        rows.append(jnp.stack(cols, axis=-1))
    return jnp.stack(rows, axis=-2)


def _avg_pools_ref(x: jax.Array):
    return tuple(_adaptive_avg_pool_ref(x, k) for k in OUT_SIZES)


if __name__ == "__main__":
    key = jax.random.PRNGKey(0)
    N, C, H, W = 2, 4, 16, 16
    x = jax.random.normal(key, (N, C, H, W), dtype=jnp.float32)

    fn = jax.jit(avg_pools)
    outs = jax.block_until_ready(fn(x))

    refs = _avg_pools_ref(x)
    for o, r, k in zip(outs, refs, OUT_SIZES):
        assert o.shape == (N, C, k, k), (o.shape, k)
        assert o.dtype == x.dtype, (o.dtype, x.dtype)
        assert jnp.allclose(o, r, atol=1e-5, rtol=1e-5), f"mismatch at out={k}"

    print("KERNEL_OK")
</pallas_src>

<mosaic_0001>
module attributes {stable_mosaic.version = 11 : i64} {
  func.func @_avgpools_kernel(%arg0: i32, %arg1: memref<8x256xf32, #tpu.memory_space<vmem>>, %arg2: memref<256x256xf32, #tpu.memory_space<vmem>>, %arg3: memref<8x16xf32, #tpu.memory_space<vmem>>, %arg4: memref<8x25xf32, #tpu.memory_space<vmem>>, %arg5: memref<8x49xf32, #tpu.memory_space<vmem>>, %arg6: memref<8x121xf32, #tpu.memory_space<vmem>>) attributes {dimension_semantics = [#tpu.dimension_semantics<parallel>], iteration_bounds = array<i64: 1>, scalar_prefetch = 0 : i64, scratch_operands = 0 : i64, tpu.core_type = #tpu.core_type<tc>, window_params = [{transform_indices = @transform_0, window_bounds = array<i64: 8, 256>}, {pipeline_mode = #tpu.pipeline_mode<synchronous>, transform_indices = @transform_1, window_bounds = array<i64: 256, 256>}, {transform_indices = @transform_2, window_bounds = array<i64: 8, 16>}, {transform_indices = @transform_3, window_bounds = array<i64: 8, 25>}, {transform_indices = @transform_4, window_bounds = array<i64: 8, 49>}, {transform_indices = @transform_5, window_bounds = array<i64: 8, 121>}]} {
    %c0 = arith.constant 0 : index
    %c0_0 = arith.constant 0 : index
    %0 = vector.load %arg1[%c0, %c0_0] : memref<8x256xf32, #tpu.memory_space<vmem>>, vector<8x256xf32>
    %c0_1 = arith.constant 0 : index
    %c0_2 = arith.constant 0 : index
    %1 = vector.load %arg2[%c0_1, %c0_2] : memref<256x256xf32, #tpu.memory_space<vmem>>, vector<256x256xf32>
    %cst = arith.constant dense<0.000000e+00> : vector<8x256xf32>
    %2 = tpu.matmul %0, %1, %cst {dimension_numbers = #tpu.dot_dimension_numbers<[1], [0], [0], [1], [0, 0, 1, 1], [], []>, precision = #tpu.contract_precision<fp32>} : vector<8x256xf32>, vector<256x256xf32>, vector<8x256xf32> -> vector<8x256xf32>
    %3 = vector.extract_strided_slice %2 {offsets = [0, 0], sizes = [8, 16], strides = [1, 1]} : vector<8x256xf32> to vector<8x16xf32>
    %c0_3 = arith.constant 0 : index
    %c0_4 = arith.constant 0 : index
    %4 = vector.load %arg3[%c0_3, %c0_4] : memref<8x16xf32, #tpu.memory_space<vmem>>, vector<8x16xf32>
    tpu.vector_store %arg3[%c0_3, %c0_4], %3 {strides = array<i32>} : memref<8x16xf32, #tpu.memory_space<vmem>>, vector<8x16xf32>,
    %5 = vector.extract_strided_slice %2 {offsets = [0, 16], sizes = [8, 25], strides = [1, 1]} : vector<8x256xf32> to vector<8x25xf32>
    %c0_5 = arith.constant 0 : index
    %c0_6 = arith.constant 0 : index
    %6 = vector.load %arg4[%c0_5, %c0_6] : memref<8x25xf32, #tpu.memory_space<vmem>>, vector<8x25xf32>
    tpu.vector_store %arg4[%c0_5, %c0_6], %5 {strides = array<i32>} : memref<8x25xf32, #tpu.memory_space<vmem>>, vector<8x25xf32>,
    %7 = vector.extract_strided_slice %2 {offsets = [0, 41], sizes = [8, 49], strides = [1, 1]} : vector<8x256xf32> to vector<8x49xf32>
    %c0_7 = arith.constant 0 : index
    %c0_8 = arith.constant 0 : index
    %8 = vector.load %arg5[%c0_7, %c0_8] : memref<8x49xf32, #tpu.memory_space<vmem>>, vector<8x49xf32>
    tpu.vector_store %arg5[%c0_7, %c0_8], %7 {strides = array<i32>} : memref<8x49xf32, #tpu.memory_space<vmem>>, vector<8x49xf32>,
    %9 = vector.extract_strided_slice %2 {offsets = [0, 90], sizes = [8, 121], strides = [1, 1]} : vector<8x256xf32> to vector<8x121xf32>
    %c0_9 = arith.constant 0 : index
    %c0_10 = arith.constant 0 : index
    %10 = vector.load %arg6[%c0_9, %c0_10] : memref<8x121xf32, #tpu.memory_space<vmem>>, vector<8x121xf32>
    tpu.vector_store %arg6[%c0_9, %c0_10], %9 {strides = array<i32>} : memref<8x121xf32, #tpu.memory_space<vmem>>, vector<8x121xf32>,
    return
  }
  func.func @transform_0(%arg0: i32) -> (i32, i32) {
    %c0_i32 = arith.constant 0 : i32
    %c0_i32_0 = arith.constant 0 : i32
    return %arg0, %c0_i32 : i32, i32
  }
  func.func @transform_1(%arg0: i32) -> (i32, i32) {
    %c0_i32 = arith.constant 0 : i32
    %c0_i32_0 = arith.constant 0 : i32
    %c0_i32_1 = arith.constant 0 : i32
    return %c0_i32, %c0_i32_0 : i32, i32
  }
  func.func @transform_2(%arg0: i32) -> (i32, i32) {
    %c0_i32 = arith.constant 0 : i32
    %c0_i32_0 = arith.constant 0 : i32
    return %arg0, %c0_i32 : i32, i32
  }
  func.func @transform_3(%arg0: i32) -> (i32, i32) {
    %c0_i32 = arith.constant 0 : i32
    %c0_i32_0 = arith.constant 0 : i32
    return %arg0, %c0_i32 : i32, i32
  }
  func.func @transform_4(%arg0: i32) -> (i32, i32) {
    %c0_i32 = arith.constant 0 : i32
    %c0_i32_0 = arith.constant 0 : i32
    return %arg0, %c0_i32 : i32, i32
  }
  func.func @transform_5(%arg0: i32) -> (i32, i32) {
    %c0_i32 = arith.constant 0 : i32
    %c0_i32_0 = arith.constant 0 : i32
    return %arg0, %c0_i32 : i32, i32
  }
}

</mosaic_0001>

<llo_original>
// kernel: avg_pools.1
$region0: #{avg_pools.1}
  #allocation0 [shape = 'u32[]', space=smem, size = 0x4, offset = 0x4, fixed_abs, tag = 'smem constant byte address 0x4 - core index']
  #allocation1 [shape = 'u32[144,128]{1,0:T(1,128)}', space=vmem, size = 0x12000, scoped, tag = 'internal scratch']
  %s0 = inlined_call_operand.vmem [shape: f32[8,256], index: 0, kind: input, shape index: {}]
  %s1 = inlined_call_operand.hbm [shape: f32[256,256], index: 1, kind: input, shape index: {}]
  %s2 = inlined_call_operand.vmem [shape: f32[8,16], index: 2, kind: output, shape index: {0}]
  %s3 = inlined_call_operand.vmem [shape: f32[8,25], index: 3, kind: output, shape index: {1}]
  %s4 = inlined_call_operand.vmem [shape: f32[8,49], index: 4, kind: output, shape index: {2}]
  %s5 = inlined_call_operand.vmem [shape: f32[8,121], index: 5, kind: output, shape index: {3}]
  %6 = xla_tuple %s2, %s3, %s4, %s5
  %s7 = sld [smem:[#allocation0]]
  $region46: #{avg_pools.1} parent=0
    _
  %s9 = ssub.s32 1, %s7
  %s10 = scalar_select 0, %s9, %s7
  $region1: #{avg_pools.1} parent=0
    #allocation2 [shape = 'u8[262144]{0}', space=vmem, size = 0x40000, scoped, tag = 'input window, operand 1, single buffered']
    #allocation3 [shape = 's32[1]{0}', space=sflag, size = 0x4, scoped, tag = 'scoped memory for avg_pools.1']
    %11 = vsyncpa [#allocation3], 0
    // Predicated region
    $region2: #{avg_pools.1} parent=1 // pred_check
      _
    $region3: #{avg_pools.1} parent=1 // pred_check_branch
      %13 = sbr.rel (0) target = $region5
    $region4: #{avg_pools.1} parent=1 // pred_region
      _
    $region5: #{avg_pools.1} parent=1 // pred_fallthru
      _
    // Predicated region
    $region6: #{avg_pools.1} parent=1 // pred_check
      _
    $region7: #{avg_pools.1} parent=1 // pred_check_branch
      %15 = sbr.rel (0) target = $region9
    $region8: #{avg_pools.1} parent=1 // pred_region
      %s17 = ssub.s32 8192, 8192
      %18 = vsyncadd [#allocation3], %s17
      %s19 = sshll.u32 [#allocation2], 4
      %s20 = int_to_ptr.vmem [resolvable:$true] %s19
      %25 = dma.hbm_to_vmem [thread:$0]  %s1, 8192, %s20, [#allocation3], 256, 256, 16
    $region9: #{avg_pools.1} parent=1 // pred_fallthru
      _
    // Predicated region
    $region10: #{avg_pools.1} parent=1 // pred_check
      _
    $region11: #{avg_pools.1} parent=1 // pred_check_branch
      %27 = sbr.rel (0) target = $region13
    $region12: #{avg_pools.1} parent=1 // pred_region
      %28 = dma.done [#allocation3], 8192
    $region13: #{avg_pools.1} parent=1 // pred_fallthru
      _
    %v29 = vld [vmem:[%s0] sm:$0xff]
    %v30 = vld [vmem:[%s0 + $0x8] sm:$0xff]
    %v31 = vld [vmem:[#allocation2] sm:$0xff]
    %v32 = vld [vmem:[#allocation2 + $0x8] sm:$0xff]
    %v33 = vld [vmem:[#allocation2 + $0x10] sm:$0xff]
    %v34 = vld [vmem:[#allocation2 + $0x18] sm:$0xff]
    %v35 = vld [vmem:[#allocation2 + $0x20] sm:$0xff]
    %v36 = vld [vmem:[#allocation2 + $0x28] sm:$0xff]
    %v37 = vld [vmem:[#allocation2 + $0x30] sm:$0xff]
    %v38 = vld [vmem:[#allocation2 + $0x38] sm:$0xff]
    %v39 = vld [vmem:[#allocation2 + $0x40] sm:$0xff]
    %v40 = vld [vmem:[#allocation2 + $0x48] sm:$0xff]
    %v41 = vld [vmem:[#allocation2 + $0x50] sm:$0xff]
    %v42 = vld [vmem:[#allocation2 + $0x58] sm:$0xff]
    %v43 = vld [vmem:[#allocation2 + $0x60] sm:$0xff]
    %v44 = vld [vmem:[#allocation2 + $0x68] sm:$0xff]
    %v45 = vld [vmem:[#allocation2 + $0x70] sm:$0xff]
    %v46 = vld [vmem:[#allocation2 + $0x78] sm:$0xff]
    %v47 = vld [vmem:[#allocation2 + $0x80] sm:$0xff]
    %v48 = vld [vmem:[#allocation2 + $0x88] sm:$0xff]
    %v49 = vld [vmem:[#allocation2 + $0x90] sm:$0xff]
    %v50 = vld [vmem:[#allocation2 + $0x98] sm:$0xff]
    %v51 = vld [vmem:[#allocation2 + $0xa0] sm:$0xff]
    %v52 = vld [vmem:[#allocation2 + $0xa8] sm:$0xff]
    %v53 = vld [vmem:[#allocation2 + $0xb0] sm:$0xff]
    %v54 = vld [vmem:[#allocation2 + $0xb8] sm:$0xff]
    %v55 = vld [vmem:[#allocation2 + $0xc0] sm:$0xff]
    %v56 = vld [vmem:[#allocation2 + $0xc8] sm:$0xff]
    %v57 = vld [vmem:[#allocation2 + $0xd0] sm:$0xff]
    %v58 = vld [vmem:[#allocation2 + $0xd8] sm:$0xff]
    %v59 = vld [vmem:[#allocation2 + $0xe0] sm:$0xff]
    %v60 = vld [vmem:[#allocation2 + $0xe8] sm:$0xff]
    %v61 = vld [vmem:[#allocation2 + $0xf0] sm:$0xff]
    %v62 = vld [vmem:[#allocation2 + $0xf8] sm:$0xff]
    %v63 = vld [vmem:[#allocation2 + $0x100] sm:$0xff]
    %v64 = vld [vmem:[#allocation2 + $0x108] sm:$0xff]
    %v65 = vld [vmem:[#allocation2 + $0x110] sm:$0xff]
    %v66 = vld [vmem:[#allocation2 + $0x118] sm:$0xff]
    %v67 = vld [vmem:[#allocation2 + $0x120] sm:$0xff]
    %v68 = vld [vmem:[#allocation2 + $0x128] sm:$0xff]
    %v69 = vld [vmem:[#allocation2 + $0x130] sm:$0xff]
    %v70 = vld [vmem:[#allocation2 + $0x138] sm:$0xff]
    %v71 = vld [vmem:[#allocation2 + $0x140] sm:$0xff]
    %v72 = vld [vmem:[#allocation2 + $0x148] sm:$0xff]
    %v73 = vld [vmem:[#allocation2 + $0x150] sm:$0xff]
    %v74 = vld [vmem:[#allocation2 + $0x158] sm:$0xff]
    %v75 = vld [vmem:[#allocation2 + $0x160] sm:$0xff]
    %v76 = vld [vmem:[#allocation2 + $0x168] sm:$0xff]
    %v77 = vld [vmem:[#allocation2 + $0x170] sm:$0xff]
    %v78 = vld [vmem:[#allocation2 + $0x178] sm:$0xff]
    %v79 = vld [vmem:[#allocation2 + $0x180] sm:$0xff]
    %v80 = vld [vmem:[#allocation2 + $0x188] sm:$0xff]
    %v81 = vld [vmem:[#allocation2 + $0x190] sm:$0xff]
    %v82 = vld [vmem:[#allocation2 + $0x198] sm:$0xff]
    %v83 = vld [vmem:[#allocation2 + $0x1a0] sm:$0xff]
    %v84 = vld [vmem:[#allocation2 + $0x1a8] sm:$0xff]
    %v85 = vld [vmem:[#allocation2 + $0x1b0] sm:$0xff]
    %v86 = vld [vmem:[#allocation2 + $0x1b8] sm:$0xff]
    %v87 = vld [vmem:[#allocation2 + $0x1c0] sm:$0xff]
    %v88 = vld [vmem:[#allocation2 + $0x1c8] sm:$0xff]
    %v89 = vld [vmem:[#allocation2 + $0x1d0] sm:$0xff]
    %v90 = vld [vmem:[#allocation2 + $0x1d8] sm:$0xff]
    %v91 = vld [vmem:[#allocation2 + $0x1e0] sm:$0xff]
    %v92 = vld [vmem:[#allocation2 + $0x1e8] sm:$0xff]
    %v93 = vld [vmem:[#allocation2 + $0x1f0] sm:$0xff]
    %v94 = vld [vmem:[#allocation2 + $0x1f8] sm:$0xff]
    %v95 = vand.u32 %v32, 4294901760
    %96 = vmatprep.subr.mxu0 %v95
    %v97 = vand.u32 %v31, 4294901760
    %98 = vmatpush1.msra.mxu0 %v97
    %v99 = vand.u32 %v34, 4294901760
    %100 = vmatprep.subr.mxu0 %v99
    %v101 = vand.u32 %v33, 4294901760
    %102 = vmatpush1.msra.mxu0 %v101
    %v103 = vand.u32 %v36, 4294901760
    %104 = vmatprep.subr.mxu0 %v103
    %v105 = vand.u32 %v35, 4294901760
    %106 = vmatpush1.msra.mxu0 %v105
    %v107 = vand.u32 %v38, 4294901760
    %108 = vmatprep.subr.mxu0 %v107
    %v109 = vand.u32 %v37, 4294901760
    %110 = vmatpush1.msra.mxu0 %v109
    %v111 = vand.u32 %v40, 4294901760
    %112 = vmatprep.subr.mxu0 %v111
    %v113 = vand.u32 %v39, 4294901760
    %114 = vmatpush1.msra.mxu0 %v113
    %v115 = vand.u32 %v42, 4294901760
    %116 = vmatprep.subr.mxu0 %v115
    %v117 = vand.u32 %v41, 4294901760
    %118 = vmatpush1.msra.mxu0 %v117
    %v119 = vand.u32 %v44, 4294901760
    %120 = vmatprep.subr.mxu0 %v119
    %v121 = vand.u32 %v43, 4294901760
    %122 = vmatpush1.msra.mxu0 %v121
    %v123 = vand.u32 %v46, 4294901760
    %124 = vmatprep.subr.mxu0 %v123
    %v125 = vand.u32 %v45, 4294901760
    %126 = vmatpush1.msra.mxu0 %v125
    %v127 = vand.u32 %v48, 4294901760
    %128 = vmatprep.subr.mxu0 %v127
    %v129 = vand.u32 %v47, 4294901760
    %130 = vmatpush1.msra.mxu0 %v129
    %v131 = vand.u32 %v50, 4294901760
    %132 = vmatprep.subr.mxu0 %v131
    %v133 = vand.u32 %v49, 4294901760
    %134 = vmatpush1.msra.mxu0 %v133
    %v135 = vand.u32 %v52, 4294901760
    %136 = vmatprep.subr.mxu0 %v135
    %v137 = vand.u32 %v51, 4294901760
    %138 = vmatpush1.msra.mxu0 %v137
    %v139 = vand.u32 %v54, 4294901760
    %140 = vmatprep.subr.mxu0 %v139
    %v141 = vand.u32 %v53, 4294901760
    %142 = vmatpush1.msra.mxu0 %v141
    %v143 = vand.u32 %v56, 4294901760
    %144 = vmatprep.subr.mxu0 %v143
    %v145 = vand.u32 %v55, 4294901760
    %146 = vmatpush1.msra.mxu0 %v145
    %v147 = vand.u32 %v58, 4294901760
    %148 = vmatprep.subr.mxu0 %v147
    %v149 = vand.u32 %v57, 4294901760
    %150 = vmatpush1.msra.mxu0 %v149
    %v151 = vand.u32 %v60, 4294901760
    %152 = vmatprep.subr.mxu0 %v151
    %v153 = vand.u32 %v59, 4294901760
    %154 = vmatpush1.msra.mxu0 %v153
    %v155 = vand.u32 %v62, 4294901760
    %156 = vmatprep.subr.mxu0 %v155
    %v157 = vand.u32 %v61, 4294901760
    %158 = vmatpush1.msra.mxu0 %v157
    %v159 = vand.u32 %v64, 4294901760
    %160 = vmatprep.subr.mxu0 %v159
    %v161 = vand.u32 %v63, 4294901760
    %162 = vmatpush1.msra.mxu0 %v161
    %v163 = vand.u32 %v66, 4294901760
    %164 = vmatprep.subr.mxu0 %v163
    %v165 = vand.u32 %v65, 4294901760
    %166 = vmatpush1.msra.mxu0 %v165
    %v167 = vand.u32 %v68, 4294901760
    %168 = vmatprep.subr.mxu0 %v167
    %v169 = vand.u32 %v67, 4294901760
    %170 = vmatpush1.msra.mxu0 %v169
    %v171 = vand.u32 %v70, 4294901760
    %172 = vmatprep.subr.mxu0 %v171
    %v173 = vand.u32 %v69, 4294901760
    %174 = vmatpush1.msra.mxu0 %v173
    %v175 = vand.u32 %v72, 4294901760
    %176 = vmatprep.subr.mxu0 %v175
    %v177 = vand.u32 %v71, 4294901760
    %178 = vmatpush1.msra.mxu0 %v177
    %v179 = vand.u32 %v74, 4294901760
    %180 = vmatprep.subr.mxu0 %v179
    %v181 = vand.u32 %v73, 4294901760
    %182 = vmatpush1.msra.mxu0 %v181
    %v183 = vand.u32 %v76, 4294901760
    %184 = vmatprep.subr.mxu0 %v183
    %v185 = vand.u32 %v75, 4294901760
    %186 = vmatpush1.msra.mxu0 %v185
    %v187 = vand.u32 %v78, 4294901760
    %188 = vmatprep.subr.mxu0 %v187
    %v189 = vand.u32 %v77, 4294901760
    %190 = vmatpush1.msra.mxu0 %v189
    %v191 = vand.u32 %v80, 4294901760
    %192 = vmatprep.subr.mxu0 %v191
    %v193 = vand.u32 %v79, 4294901760
    %194 = vmatpush1.msra.mxu0 %v193
    %v195 = vand.u32 %v82, 4294901760
    %196 = vmatprep.subr.mxu0 %v195
    %v197 = vand.u32 %v81, 4294901760
    %198 = vmatpush1.msra.mxu0 %v197
    %v199 = vand.u32 %v84, 4294901760
    %200 = vmatprep.subr.mxu0 %v199
    %v201 = vand.u32 %v83, 4294901760
    %202 = vmatpush1.msra.mxu0 %v201
    %v203 = vand.u32 %v86, 4294901760
    %204 = vmatprep.subr.mxu0 %v203
    %v205 = vand.u32 %v85, 4294901760
    %206 = vmatpush1.msra.mxu0 %v205
    %v207 = vand.u32 %v88, 4294901760
    %208 = vmatprep.subr.mxu0 %v207
    %v209 = vand.u32 %v87, 4294901760
    %210 = vmatpush1.msra.mxu0 %v209
    %v211 = vand.u32 %v90, 4294901760
    %212 = vmatprep.subr.mxu0 %v211
    %v213 = vand.u32 %v89, 4294901760
    %214 = vmatpush1.msra.mxu0 %v213
    %v215 = vand.u32 %v92, 4294901760
    %216 = vmatprep.subr.mxu0 %v215
    %v217 = vand.u32 %v91, 4294901760
    %218 = vmatpush1.msra.mxu0 %v217
    %v219 = vand.u32 %v94, 4294901760
    %220 = vmatprep.subr.mxu0 %v219
    %v221 = vand.u32 %v93, 4294901760
    %222 = vmatpush1.msra.mxu0 %v221
    %v223 = vand.u32 %v30, 4294901760
    %v224 = vsub.f32 %v30, %v223
    %v225 = vand.u32 %v224, 4294901760
    %v226 = vsub.f32 %v224, %v225
    %v227 = vand.u32 %v226, 4294901760
    %228 = vmatprep.mubr.f32.mxu0 %v227
    %v229 = vand.u32 %v29, 4294901760
    %v230 = vsub.f32 %v29, %v229
    %v231 = vand.u32 %v230, 4294901760
    %v232 = vsub.f32 %v230, %v231
    %v233 = vand.u32 %v232, 4294901760
    %234 = vmatmul.mubr.f32.gmra.mrb[0].mxu0 %v233
    %v235 = vpop.f32.mrb[0].mxu0
    %v236 = vadd.f32 0.0, %v235
    %v237 = vpop.f32.mrb[0].mxu0
    %v238 = vadd.f32 0.0, %v237
    %239 = vdwg.mxu0
    %v240 = vand.u32 %v32, 4294901760
    %v241 = vsub.f32 %v32, %v240
    %v242 = vand.u32 %v241, 4294901760
    %v243 = vsub.f32 %v241, %v242
    %v244 = vand.u32 %v243, 4294901760
    %245 = vmatprep.subr.mxu0 %v244
    %v246 = vand.u32 %v31, 4294901760
    %v247 = vsub.f32 %v31, %v246
    %v248 = vand.u32 %v247, 4294901760
    %v249 = vsub.f32 %v247, %v248
    %v250 = vand.u32 %v249, 4294901760
    %251 = vmatpush1.msra.mxu0 %v250
    %v252 = vand.u32 %v34, 4294901760
    %v253 = vsub.f32 %v34, %v252
    %v254 = vand.u32 %v253, 4294901760
    %v255 = vsub.f32 %v253, %v254
    %v256 = vand.u32 %v255, 4294901760
    %257 = vmatprep.subr.mxu0 %v256
    %v258 = vand.u32 %v33, 4294901760
    %v259 = vsub.f32 %v33, %v258
    %v260 = vand.u32 %v259, 4294901760
    %v261 = vsub.f32 %v259, %v260
    %v262 = vand.u32 %v261, 4294901760
    %263 = vmatpush1.msra.mxu0 %v262
    %v264 = vand.u32 %v36, 4294901760
    %v265 = vsub.f32 %v36, %v264
    %v266 = vand.u32 %v265, 4294901760
    %v267 = vsub.f32 %v265, %v266
    %v268 = vand.u32 %v267, 4294901760
    %269 = vmatprep.subr.mxu0 %v268
    %v270 = vand.u32 %v35, 4294901760
    %v271 = vsub.f32 %v35, %v270
    %v272 = vand.u32 %v271, 4294901760
    %v273 = vsub.f32 %v271, %v272
    %v274 = vand.u32 %v273, 4294901760
    %275 = vmatpush1.msra.mxu0 %v274
    %v276 = vand.u32 %v38, 4294901760
    %v277 = vsub.f32 %v38, %v276
    %v278 = vand.u32 %v277, 4294901760
    %v279 = vsub.f32 %v277, %v278
    %v280 = vand.u32 %v279, 4294901760
    %281 = vmatprep.subr.mxu0 %v280
    %v282 = vand.u32 %v37, 4294901760
    %v283 = vsub.f32 %v37, %v282
    %v284 = vand.u32 %v283, 4294901760
    %v285 = vsub.f32 %v283, %v284
    %v286 = vand.u32 %v285, 4294901760
    %287 = vmatpush1.msra.mxu0 %v286
    %v288 = vand.u32 %v40, 4294901760
    %v289 = vsub.f32 %v40, %v288
    %v290 = vand.u32 %v289, 4294901760
    %v291 = vsub.f32 %v289, %v290
    %v292 = vand.u32 %v291, 4294901760
    %293 = vmatprep.subr.mxu0 %v292
    %v294 = vand.u32 %v39, 4294901760
    %v295 = vsub.f32 %v39, %v294
    %v296 = vand.u32 %v295, 4294901760
    %v297 = vsub.f32 %v295, %v296
    %v298 = vand.u32 %v297, 4294901760
    %299 = vmatpush1.msra.mxu0 %v298
    %v300 = vand.u32 %v42, 4294901760
    %v301 = vsub.f32 %v42, %v300
    %v302 = vand.u32 %v301, 4294901760
    %v303 = vsub.f32 %v301, %v302
    %v304 = vand.u32 %v303, 4294901760
    %305 = vmatprep.subr.mxu0 %v304
    %v306 = vand.u32 %v41, 4294901760
    %v307 = vsub.f32 %v41, %v306
    %v308 = vand.u32 %v307, 4294901760
    %v309 = vsub.f32 %v307, %v308
    %v310 = vand.u32 %v309, 4294901760
    %311 = vmatpush1.msra.mxu0 %v310
    %v312 = vand.u32 %v44, 4294901760
    %v313 = vsub.f32 %v44, %v312
    %v314 = vand.u32 %v313, 4294901760
    %v315 = vsub.f32 %v313, %v314
    %v316 = vand.u32 %v315, 4294901760
    %317 = vmatprep.subr.mxu0 %v316
    %v318 = vand.u32 %v43, 4294901760
    %v319 = vsub.f32 %v43, %v318
    %v320 = vand.u32 %v319, 4294901760
    %v321 = vsub.f32 %v319, %v320
    %v322 = vand.u32 %v321, 4294901760
    %323 = vmatpush1.msra.mxu0 %v322
    %v324 = vand.u32 %v46, 4294901760
    %v325 = vsub.f32 %v46, %v324
    %v326 = vand.u32 %v325, 4294901760
    %v327 = vsub.f32 %v325, %v326
    %v328 = vand.u32 %v327, 4294901760
    %329 = vmatprep.subr.mxu0 %v328
    %v330 = vand.u32 %v45, 4294901760
    %v331 = vsub.f32 %v45, %v330
    %v332 = vand.u32 %v331, 4294901760
    %v333 = vsub.f32 %v331, %v332
    %v334 = vand.u32 %v333, 4294901760
    %335 = vmatpush1.msra.mxu0 %v334
    %v336 = vand.u32 %v48, 4294901760
    %v337 = vsub.f32 %v48, %v336
    %v338 = vand.u32 %v337, 4294901760
    %v339 = vsub.f32 %v337, %v338
    %v340 = vand.u32 %v339, 4294901760
    %341 = vmatprep.subr.mxu0 %v340
    %v342 = vand.u32 %v47, 4294901760
    %v343 = vsub.f32 %v47, %v342
    %v344 = vand.u32 %v343, 4294901760
    %v345 = vsub.f32 %v343, %v344
    %v346 = vand.u32 %v345, 4294901760
    %347 = vmatpush1.msra.mxu0 %v346
    %v348 = vand.u32 %v50, 4294901760
    %v349 = vsub.f32 %v50, %v348
    %v350 = vand.u32 %v349, 4294901760
    %v351 = vsub.f32 %v349, %v350
    %v352 = vand.u32 %v351, 4294901760
    %353 = vmatprep.subr.mxu0 %v352
    %v354 = vand.u32 %v49, 4294901760
    %v355 = vsub.f32 %v49, %v354
    %v356 = vand.u32 %v355, 4294901760
    %v357 = vsub.f32 %v355, %v356
    %v358 = vand.u32 %v357, 4294901760
    %359 = vmatpush1.msra.mxu0 %v358
    %v360 = vand.u32 %v52, 4294901760
    %v361 = vsub.f32 %v52, %v360
    %v362 = vand.u32 %v361, 4294901760
    %v363 = vsub.f32 %v361, %v362
    %v364 = vand.u32 %v363, 4294901760
    %365 = vmatprep.subr.mxu0 %v364
    %v366 = vand.u32 %v51, 4294901760
    %v367 = vsub.f32 %v51, %v366
    %v368 = vand.u32 %v367, 4294901760
    %v369 = vsub.f32 %v367, %v368
    %v370 = vand.u32 %v369, 4294901760
    %371 = vmatpush1.msra.mxu0 %v370
    %v372 = vand.u32 %v54, 4294901760
    %v373 = vsub.f32 %v54, %v372
    %v374 = vand.u32 %v373, 4294901760
    %v375 = vsub.f32 %v373, %v374
    %v376 = vand.u32 %v375, 4294901760
    %377 = vmatprep.subr.mxu0 %v376
    %v378 = vand.u32 %v53, 4294901760
    %v379 = vsub.f32 %v53, %v378
    %v380 = vand.u32 %v379, 4294901760
    %v381 = vsub.f32 %v379, %v380
    %v382 = vand.u32 %v381, 4294901760
    %383 = vmatpush1.msra.mxu0 %v382
    %v384 = vand.u32 %v56, 4294901760
    %v385 = vsub.f32 %v56, %v384
    %v386 = vand.u32 %v385, 4294901760
    %v387 = vsub.f32 %v385, %v386
    %v388 = vand.u32 %v387, 4294901760
    %389 = vmatprep.subr.mxu0 %v388
    %v390 = vand.u32 %v55, 4294901760
    %v391 = vsub.f32 %v55, %v390
    %v392 = vand.u32 %v391, 4294901760
    %v393 = vsub.f32 %v391, %v392
    %v394 = vand.u32 %v393, 4294901760
    %395 = vmatpush1.msra.mxu0 %v394
    %v396 = vand.u32 %v58, 4294901760
    %v397 = vsub.f32 %v58, %v396
    %v398 = vand.u32 %v397, 4294901760
    %v399 = vsub.f32 %v397, %v398
    %v400 = vand.u32 %v399, 4294901760
    %401 = vmatprep.subr.mxu0 %v400
    %v402 = vand.u32 %v57, 4294901760
    %v403 = vsub.f32 %v57, %v402
    %v404 = vand.u32 %v403, 4294901760
    %v405 = vsub.f32 %v403, %v404
    %v406 = vand.u32 %v405, 4294901760
    %407 = vmatpush1.msra.mxu0 %v406
    %v408 = vand.u32 %v60, 4294901760
    %v409 = vsub.f32 %v60, %v408
    %v410 = vand.u32 %v409, 4294901760
    %v411 = vsub.f32 %v409, %v410
    %v412 = vand.u32 %v411, 4294901760
    %413 = vmatprep.subr.mxu0 %v412
    %v414 = vand.u32 %v59, 4294901760
    %v415 = vsub.f32 %v59, %v414
    %v416 = vand.u32 %v415, 4294901760
    %v417 = vsub.f32 %v415, %v416
    %v418 = vand.u32 %v417, 4294901760
    %419 = vmatpush1.msra.mxu0 %v418
    %v420 = vand.u32 %v62, 4294901760
    %v421 = vsub.f32 %v62, %v420
    %v422 = vand.u32 %v421, 4294901760
    %v423 = vsub.f32 %v421, %v422
    %v424 = vand.u32 %v423, 4294901760
    %425 = vmatprep.subr.mxu0 %v424
    %v426 = vand.u32 %v61, 4294901760
    %v427 = vsub.f32 %v61, %v426
    %v428 = vand.u32 %v427, 4294901760
    %v429 = vsub.f32 %v427, %v428
    %v430 = vand.u32 %v429, 4294901760
    %431 = vmatpush1.msra.mxu0 %v430
    %v432 = vand.u32 %v64, 4294901760
    %v433 = vsub.f32 %v64, %v432
    %v434 = vand.u32 %v433, 4294901760
    %v435 = vsub.f32 %v433, %v434
    %v436 = vand.u32 %v435, 4294901760
    %437 = vmatprep.subr.mxu0 %v436
    %v438 = vand.u32 %v63, 4294901760
    %v439 = vsub.f32 %v63, %v438
    %v440 = vand.u32 %v439, 4294901760
    %v441 = vsub.f32 %v439, %v440
    %v442 = vand.u32 %v441, 4294901760
    %443 = vmatpush1.msra.mxu0 %v442
    %v444 = vand.u32 %v66, 4294901760
    %v445 = vsub.f32 %v66, %v444
    %v446 = vand.u32 %v445, 4294901760
    %v447 = vsub.f32 %v445, %v446
    %v448 = vand.u32 %v447, 4294901760
    %449 = vmatprep.subr.mxu0 %v448
    %v450 = vand.u32 %v65, 4294901760
    %v451 = vsub.f32 %v65, %v450
    %v452 = vand.u32 %v451, 4294901760
    %v453 = vsub.f32 %v451, %v452
    %v454 = vand.u32 %v453, 4294901760
    %455 = vmatpush1.msra.mxu0 %v454
    %v456 = vand.u32 %v68, 4294901760
    %v457 = vsub.f32 %v68, %v456
    %v458 = vand.u32 %v457, 4294901760
    %v459 = vsub.f32 %v457, %v458
    %v460 = vand.u32 %v459, 4294901760
    %461 = vmatprep.subr.mxu0 %v460
    %v462 = vand.u32 %v67, 4294901760
    %v463 = vsub.f32 %v67, %v462
    %v464 = vand.u32 %v463, 4294901760
    %v465 = vsub.f32 %v463, %v464
    %v466 = vand.u32 %v465, 4294901760
    %467 = vmatpush1.msra.mxu0 %v466
    %v468 = vand.u32 %v70, 4294901760
    %v469 = vsub.f32 %v70, %v468
    %v470 = vand.u32 %v469, 4294901760
    %v471 = vsub.f32 %v469, %v470
    %v472 = vand.u32 %v471, 4294901760
    %473 = vmatprep.subr.mxu0 %v472
    %v474 = vand.u32 %v69, 4294901760
    %v475 = vsub.f32 %v69, %v474
    %v476 = vand.u32 %v475, 4294901760
    %v477 = vsub.f32 %v475, %v476
    %v478 = vand.u32 %v477, 4294901760
    %479 = vmatpush1.msra.mxu0 %v478
    %v480 = vand.u32 %v72, 4294901760
    %v481 = vsub.f32 %v72, %v480
    %v482 = vand.u32 %v481, 4294901760
    %v483 = vsub.f32 %v481, %v482
    %v484 = vand.u32 %v483, 4294901760
    %485 = vmatprep.subr.mxu0 %v484
    %v486 = vand.u32 %v71, 4294901760
    %v487 = vsub.f32 %v71, %v486
    %v488 = vand.u32 %v487, 4294901760
    %v489 = vsub.f32 %v487, %v488
    %v490 = vand.u32 %v489, 4294901760
    %491 = vmatpush1.msra.mxu0 %v490
    %v492 = vand.u32 %v74, 4294901760
    %v493 = vsub.f32 %v74, %v492
    %v494 = vand.u32 %v493, 4294901760
    %v495 = vsub.f32 %v493, %v494
    %v496 = vand.u32 %v495, 4294901760
    %497 = vmatprep.subr.mxu0 %v496
    %v498 = vand.u32 %v73, 4294901760
    %v499 = vsub.f32 %v73, %v498
    %v500 = vand.u32 %v499, 4294901760
    %v501 = vsub.f32 %v499, %v500
    %v502 = vand.u32 %v501, 4294901760
    %503 = vmatpush1.msra.mxu0 %v502
    %v504 = vand.u32 %v76, 4294901760
    %v505 = vsub.f32 %v76, %v504
    %v506 = vand.u32 %v505, 4294901760
    %v507 = vsub.f32 %v505, %v506
    %v508 = vand.u32 %v507, 4294901760
    %509 = vmatprep.subr.mxu0 %v508
    %v510 = vand.u32 %v75, 4294901760
    %v511 = vsub.f32 %v75, %v510
    %v512 = vand.u32 %v511, 4294901760
    %v513 = vsub.f32 %v511, %v512
    %v514 = vand.u32 %v513, 4294901760
    %515 = vmatpush1.msra.mxu0 %v514
    %v516 = vand.u32 %v78, 4294901760
    %v517 = vsub.f32 %v78, %v516
    %v518 = vand.u32 %v517, 4294901760
    %v519 = vsub.f32 %v517, %v518
    %v520 = vand.u32 %v519, 4294901760
    %521 = vmatprep.subr.mxu0 %v520
    %v522 = vand.u32 %v77, 4294901760
    %v523 = vsub.f32 %v77, %v522
    %v524 = vand.u32 %v523, 4294901760
    %v525 = vsub.f32 %v523, %v524
    %v526 = vand.u32 %v525, 4294901760
    %527 = vmatpush1.msra.mxu0 %v526
    %v528 = vand.u32 %v80, 4294901760
    %v529 = vsub.f32 %v80, %v528
    %v530 = vand.u32 %v529, 4294901760
    %v531 = vsub.f32 %v529, %v530
    %v532 = vand.u32 %v531, 4294901760
    %533 = vmatprep.subr.mxu0 %v532
    %v534 = vand.u32 %v79, 4294901760
    %v535 = vsub.f32 %v79, %v534
    %v536 = vand.u32 %v535, 4294901760
    %v537 = vsub.f32 %v535, %v536
    %v538 = vand.u32 %v537, 4294901760
    %539 = vmatpush1.msra.mxu0 %v538
    %v540 = vand.u32 %v82, 4294901760
    %v541 = vsub.f32 %v82, %v540
    %v542 = vand.u32 %v541, 4294901760
    %v543 = vsub.f32 %v541, %v542
    %v544 = vand.u32 %v543, 4294901760
    %545 = vmatprep.subr.mxu0 %v544
    %v546 = vand.u32 %v81, 4294901760
    %v547 = vsub.f32 %v81, %v546
    %v548 = vand.u32 %v547, 4294901760
    %v549 = vsub.f32 %v547, %v548
    %v550 = vand.u32 %v549, 4294901760
    %551 = vmatpush1.msra.mxu0 %v550
    %v552 = vand.u32 %v84, 4294901760
    %v553 = vsub.f32 %v84, %v552
    %v554 = vand.u32 %v553, 4294901760
    %v555 = vsub.f32 %v553, %v554
    %v556 = vand.u32 %v555, 4294901760
    %557 = vmatprep.subr.mxu0 %v556
    %v558 = vand.u32 %v83, 4294901760
    %v559 = vsub.f32 %v83, %v558
    %v560 = vand.u32 %v559, 4294901760
    %v561 = vsub.f32 %v559, %v560
    %v562 = vand.u32 %v561, 4294901760
    %563 = vmatpush1.msra.mxu0 %v562
    %v564 = vand.u32 %v86, 4294901760
    %v565 = vsub.f32 %v86, %v564
    %v566 = vand.u32 %v565, 4294901760
    %v567 = vsub.f32 %v565, %v566
    %v568 = vand.u32 %v567, 4294901760
    %569 = vmatprep.subr.mxu0 %v568
    %v570 = vand.u32 %v85, 4294901760
    %v571 = vsub.f32 %v85, %v570
    %v572 = vand.u32 %v571, 4294901760
    %v573 = vsub.f32 %v571, %v572
    %v574 = vand.u32 %v573, 4294901760
    %575 = vmatpush1.msra.mxu0 %v574
    %v576 = vand.u32 %v88, 4294901760
    %v577 = vsub.f32 %v88, %v576
    %v578 = vand.u32 %v577, 4294901760
    %v579 = vsub.f32 %v577, %v578
    %v580 = vand.u32 %v579, 4294901760
    %581 = vmatprep.subr.mxu0 %v580
    %v582 = vand.u32 %v87, 4294901760
    %v583 = vsub.f32 %v87, %v582
    %v584 = vand.u32 %v583, 4294901760
    %v585 = vsub.f32 %v583, %v584
    %v586 = vand.u32 %v585, 4294901760
    %587 = vmatpush1.msra.mxu0 %v586
    %v588 = vand.u32 %v90, 4294901760
    %v589 = vsub.f32 %v90, %v588
    %v590 = vand.u32 %v589, 4294901760
    %v591 = vsub.f32 %v589, %v590
    %v592 = vand.u32 %v591, 4294901760
    %593 = vmatprep.subr.mxu0 %v592
    %v594 = vand.u32 %v89, 4294901760
    %v595 = vsub.f32 %v89, %v594
    %v596 = vand.u32 %v595, 4294901760
    %v597 = vsub.f32 %v595, %v596
    %v598 = vand.u32 %v597, 4294901760
    %599 = vmatpush1.msra.mxu0 %v598
    %v600 = vand.u32 %v92, 4294901760
    %v601 = vsub.f32 %v92, %v600
    %v602 = vand.u32 %v601, 4294901760
    %v603 = vsub.f32 %v601, %v602
    %v604 = vand.u32 %v603, 4294901760
    %605 = vmatprep.subr.mxu0 %v604
    %v606 = vand.u32 %v91, 4294901760
    %v607 = vsub.f32 %v91, %v606
    %v608 = vand.u32 %v607, 4294901760
    %v609 = vsub.f32 %v607, %v608
    %v610 = vand.u32 %v609, 4294901760
    %611 = vmatpush1.msra.mxu0 %v610
    %v612 = vand.u32 %v94, 4294901760
    %v613 = vsub.f32 %v94, %v612
    %v614 = vand.u32 %v613, 4294901760
    %v615 = vsub.f32 %v613, %v614
    %v616 = vand.u32 %v615, 4294901760
    %617 = vmatprep.subr.mxu0 %v616
    %v618 = vand.u32 %v93, 4294901760
    %v619 = vsub.f32 %v93, %v618
    %v620 = vand.u32 %v619, 4294901760
    %v621 = vsub.f32 %v619, %v620
    %v622 = vand.u32 %v621, 4294901760
    %623 = vmatpush1.msra.mxu0 %v622
    %v624 = vand.u32 %v30, 4294901760
    %625 = vmatprep.mubr.f32.mxu0 %v624
    %v626 = vand.u32 %v29, 4294901760
    %627 = vmatmul.mubr.f32.gmra.mrb[0].mxu0 %v626
    %v628 = vpop.f32.mrb[0].mxu0
    %v629 = vadd.f32 %v236, %v628
    %v630 = vpop.f32.mrb[0].mxu0
    %v631 = vadd.f32 %v238, %v630
    %632 = vdwg.mxu0
    %v633 = vand.u32 %v32, 4294901760
    %v634 = vsub.f32 %v32, %v633
    %635 = vmatprep.subr.mxu0 %v634
    %v636 = vand.u32 %v31, 4294901760
    %v637 = vsub.f32 %v31, %v636
    %638 = vmatpush1.msra.mxu0 %v637
    %v639 = vand.u32 %v34, 4294901760
    %v640 = vsub.f32 %v34, %v639
    %641 = vmatprep.subr.mxu0 %v640
    %v642 = vand.u32 %v33, 4294901760
    %v643 = vsub.f32 %v33, %v642
    %644 = vmatpush1.msra.mxu0 %v643
    %v645 = vand.u32 %v36, 4294901760
    %v646 = vsub.f32 %v36, %v645
    %647 = vmatprep.subr.mxu0 %v646
    %v648 = vand.u32 %v35, 4294901760
    %v649 = vsub.f32 %v35, %v648
    %650 = vmatpush1.msra.mxu0 %v649
    %v651 = vand.u32 %v38, 4294901760
    %v652 = vsub.f32 %v38, %v651
    %653 = vmatprep.subr.mxu0 %v652
    %v654 = vand.u32 %v37, 4294901760
    %v655 = vsub.f32 %v37, %v654
    %656 = vmatpush1.msra.mxu0 %v655
    %v657 = vand.u32 %v40, 4294901760
    %v658 = vsub.f32 %v40, %v657
    %659 = vmatprep.subr.mxu0 %v658
    %v660 = vand.u32 %v39, 4294901760
    %v661 = vsub.f32 %v39, %v660
    %662 = vmatpush1.msra.mxu0 %v661
    %v663 = vand.u32 %v42, 4294901760
    %v664 = vsub.f32 %v42, %v663
    %665 = vmatprep.subr.mxu0 %v664
    %v666 = vand.u32 %v41, 4294901760
    %v667 = vsub.f32 %v41, %v666
    %668 = vmatpush1.msra.mxu0 %v667
    %v669 = vand.u32 %v44, 4294901760
    %v670 = vsub.f32 %v44, %v669
    %671 = vmatprep.subr.mxu0 %v670
    %v672 = vand.u32 %v43, 4294901760
    %v673 = vsub.f32 %v43, %v672
    %674 = vmatpush1.msra.mxu0 %v673
    %v675 = vand.u32 %v46, 4294901760
    %v676 = vsub.f32 %v46, %v675
    %677 = vmatprep.subr.mxu0 %v676
    %v678 = vand.u32 %v45, 4294901760
    %v679 = vsub.f32 %v45, %v678
    %680 = vmatpush1.msra.mxu0 %v679
    %v681 = vand.u32 %v48, 4294901760
    %v682 = vsub.f32 %v48, %v681
    %683 = vmatprep.subr.mxu0 %v682
    %v684 = vand.u32 %v47, 4294901760
    %v685 = vsub.f32 %v47, %v684
    %686 = vmatpush1.msra.mxu0 %v685
    %v687 = vand.u32 %v50, 4294901760
    %v688 = vsub.f32 %v50, %v687
    %689 = vmatprep.subr.mxu0 %v688
    %v690 = vand.u32 %v49, 4294901760
    %v691 = vsub.f32 %v49, %v690
    %692 = vmatpush1.msra.mxu0 %v691
    %v693 = vand.u32 %v52, 4294901760
    %v694 = vsub.f32 %v52, %v693
    %695 = vmatprep.subr.mxu0 %v694
    %v696 = vand.u32 %v51, 4294901760
    %v697 = vsub.f32 %v51, %v696
    %698 = vmatpush1.msra.mxu0 %v697
    %v699 = vand.u32 %v54, 4294901760
    %v700 = vsub.f32 %v54, %v699
    %701 = vmatprep.subr.mxu0 %v700
    %v702 = vand.u32 %v53, 4294901760
    %v703 = vsub.f32 %v53, %v702
    %704 = vmatpush1.msra.mxu0 %v703
    %v705 = vand.u32 %v56, 4294901760
    %v706 = vsub.f32 %v56, %v705
    %707 = vmatprep.subr.mxu0 %v706
    %v708 = vand.u32 %v55, 4294901760
    %v709 = vsub.f32 %v55, %v708
    %710 = vmatpush1.msra.mxu0 %v709
    %v711 = vand.u32 %v58, 4294901760
    %v712 = vsub.f32 %v58, %v711
    %713 = vmatprep.subr.mxu0 %v712
    %v714 = vand.u32 %v57, 4294901760
    %v715 = vsub.f32 %v57, %v714
    %716 = vmatpush1.msra.mxu0 %v715
    %v717 = vand.u32 %v60, 4294901760
    %v718 = vsub.f32 %v60, %v717
    %719 = vmatprep.subr.mxu0 %v718
    %v720 = vand.u32 %v59, 4294901760
    %v721 = vsub.f32 %v59, %v720
    %722 = vmatpush1.msra.mxu0 %v721
    %v723 = vand.u32 %v62, 4294901760
    %v724 = vsub.f32 %v62, %v723
    %725 = vmatprep.subr.mxu0 %v724
    %v726 = vand.u32 %v61, 4294901760
    %v727 = vsub.f32 %v61, %v726
    %728 = vmatpush1.msra.mxu0 %v727
    %v729 = vand.u32 %v64, 4294901760
    %v730 = vsub.f32 %v64, %v729
    %731 = vmatprep.subr.mxu0 %v730
    %v732 = vand.u32 %v63, 4294901760
    %v733 = vsub.f32 %v63, %v732
    %734 = vmatpush1.msra.mxu0 %v733
    %v735 = vand.u32 %v66, 4294901760
    %v736 = vsub.f32 %v66, %v735
    %737 = vmatprep.subr.mxu0 %v736
    %v738 = vand.u32 %v65, 4294901760
    %v739 = vsub.f32 %v65, %v738
    %740 = vmatpush1.msra.mxu0 %v739
    %v741 = vand.u32 %v68, 4294901760
    %v742 = vsub.f32 %v68, %v741
    %743 = vmatprep.subr.mxu0 %v742
    %v744 = vand.u32 %v67, 4294901760
    %v745 = vsub.f32 %v67, %v744
    %746 = vmatpush1.msra.mxu0 %v745
    %v747 = vand.u32 %v70, 4294901760
    %v748 = vsub.f32 %v70, %v747
    %749 = vmatprep.subr.mxu0 %v748
    %v750 = vand.u32 %v69, 4294901760
    %v751 = vsub.f32 %v69, %v750
    %752 = vmatpush1.msra.mxu0 %v751
    %v753 = vand.u32 %v72, 4294901760
    %v754 = vsub.f32 %v72, %v753
    %755 = vmatprep.subr.mxu0 %v754
    %v756 = vand.u32 %v71, 4294901760
    %v757 = vsub.f32 %v71, %v756
    %758 = vmatpush1.msra.mxu0 %v757
    %v759 = vand.u32 %v74, 4294901760
    %v760 = vsub.f32 %v74, %v759
    %761 = vmatprep.subr.mxu0 %v760
    %v762 = vand.u32 %v73, 4294901760
    %v763 = vsub.f32 %v73, %v762
    %764 = vmatpush1.msra.mxu0 %v763
    %v765 = vand.u32 %v76, 4294901760
    %v766 = vsub.f32 %v76, %v765
    %767 = vmatprep.subr.mxu0 %v766
    %v768 = vand.u32 %v75, 4294901760
    %v769 = vsub.f32 %v75, %v768
    %770 = vmatpush1.msra.mxu0 %v769
    %v771 = vand.u32 %v78, 4294901760
    %v772 = vsub.f32 %v78, %v771
    %773 = vmatprep.subr.mxu0 %v772
    %v774 = vand.u32 %v77, 4294901760
    %v775 = vsub.f32 %v77, %v774
    %776 = vmatpush1.msra.mxu0 %v775
    %v777 = vand.u32 %v80, 4294901760
    %v778 = vsub.f32 %v80, %v777
    %779 = vmatprep.subr.mxu0 %v778
    %v780 = vand.u32 %v79, 4294901760
    %v781 = vsub.f32 %v79, %v780
    %782 = vmatpush1.msra.mxu0 %v781
    %v783 = vand.u32 %v82, 4294901760
    %v784 = vsub.f32 %v82, %v783
    %785 = vmatprep.subr.mxu0 %v784
    %v786 = vand.u32 %v81, 4294901760
    %v787 = vsub.f32 %v81, %v786
    %788 = vmatpush1.msra.mxu0 %v787
    %v789 = vand.u32 %v84, 4294901760
    %v790 = vsub.f32 %v84, %v789
    %791 = vmatprep.subr.mxu0 %v790
    %v792 = vand.u32 %v83, 4294901760
    %v793 = vsub.f32 %v83, %v792
    %794 = vmatpush1.msra.mxu0 %v793
    %v795 = vand.u32 %v86, 4294901760
    %v796 = vsub.f32 %v86, %v795
    %797 = vmatprep.subr.mxu0 %v796
    %v798 = vand.u32 %v85, 4294901760
    %v799 = vsub.f32 %v85, %v798
    %800 = vmatpush1.msra.mxu0 %v799
    %v801 = vand.u32 %v88, 4294901760
    %v802 = vsub.f32 %v88, %v801
    %803 = vmatprep.subr.mxu0 %v802
    %v804 = vand.u32 %v87, 4294901760
    %v805 = vsub.f32 %v87, %v804
    %806 = vmatpush1.msra.mxu0 %v805
    %v807 = vand.u32 %v90, 4294901760
    %v808 = vsub.f32 %v90, %v807
    %809 = vmatprep.subr.mxu0 %v808
    %v810 = vand.u32 %v89, 4294901760
    %v811 = vsub.f32 %v89, %v810
    %812 = vmatpush1.msra.mxu0 %v811
    %v813 = vand.u32 %v92, 4294901760
    %v814 = vsub.f32 %v92, %v813
    %815 = vmatprep.subr.mxu0 %v814
    %v816 = vand.u32 %v91, 4294901760
    %v817 = vsub.f32 %v91, %v816
    %818 = vmatpush1.msra.mxu0 %v817
    %v819 = vand.u32 %v94, 4294901760
    %v820 = vsub.f32 %v94, %v819
    %821 = vmatprep.subr.mxu0 %v820
    %v822 = vand.u32 %v93, 4294901760
    %v823 = vsub.f32 %v93, %v822
    %824 = vmatpush1.msra.mxu0 %v823
    %v825 = vand.u32 %v30, 4294901760
    %v826 = vsub.f32 %v30, %v825
    %827 = vmatprep.mubr.f32.mxu0 %v826
    %v828 = vand.u32 %v29, 4294901760
    %v829 = vsub.f32 %v29, %v828
    %830 = vmatmul.mubr.f32.gmra.mrb[0].mxu0 %v829
    %v831 = vpop.f32.mrb[0].mxu0
    %v832 = vadd.f32 %v629, %v831
    %v833 = vpop.f32.mrb[0].mxu0
    %v834 = vadd.f32 %v631, %v833
    %835 = vdwg.mxu0
    %v836 = vand.u32 %v32, 4294901760
    %837 = vmatprep.subr.mxu0 %v836
    %v838 = vand.u32 %v31, 4294901760
    %839 = vmatpush1.msra.mxu0 %v838
    %v840 = vand.u32 %v34, 4294901760
    %841 = vmatprep.subr.mxu0 %v840
    %v842 = vand.u32 %v33, 4294901760
    %843 = vmatpush1.msra.mxu0 %v842
    %v844 = vand.u32 %v36, 4294901760
    %845 = vmatprep.subr.mxu0 %v844
    %v846 = vand.u32 %v35, 4294901760
    %847 = vmatpush1.msra.mxu0 %v846
    %v848 = vand.u32 %v38, 4294901760
    %849 = vmatprep.subr.mxu0 %v848
    %v850 = vand.u32 %v37, 4294901760
    %851 = vmatpush1.msra.mxu0 %v850
    %v852 = vand.u32 %v40, 4294901760
    %853 = vmatprep.subr.mxu0 %v852
    %v854 = vand.u32 %v39, 4294901760
    %855 = vmatpush1.msra.mxu0 %v854
    %v856 = vand.u32 %v42, 4294901760
    %857 = vmatprep.subr.mxu0 %v856
    %v858 = vand.u32 %v41, 4294901760
    %859 = vmatpush1.msra.mxu0 %v858
    %v860 = vand.u32 %v44, 4294901760
    %861 = vmatprep.subr.mxu0 %v860
    %v862 = vand.u32 %v43, 4294901760
    %863 = vmatpush1.msra.mxu0 %v862
    %v864 = vand.u32 %v46, 4294901760
    %865 = vmatprep.subr.mxu0 %v864
    %v866 = vand.u32 %v45, 4294901760
    %867 = vmatpush1.msra.mxu0 %v866
    %v868 = vand.u32 %v48, 4294901760
    %869 = vmatprep.subr.mxu0 %v868
    %v870 = vand.u32 %v47, 4294901760
    %871 = vmatpush1.msra.mxu0 %v870
    %v872 = vand.u32 %v50, 4294901760
    %873 = vmatprep.subr.mxu0 %v872
    %v874 = vand.u32 %v49, 4294901760
    %875 = vmatpush1.msra.mxu0 %v874
    %v876 = vand.u32 %v52, 4294901760
    %877 = vmatprep.subr.mxu0 %v876
    %v878 = vand.u32 %v51, 4294901760
    %879 = vmatpush1.msra.mxu0 %v878
    %v880 = vand.u32 %v54, 4294901760
    %881 = vmatprep.subr.mxu0 %v880
    %v882 = vand.u32 %v53, 4294901760
    %883 = vmatpush1.msra.mxu0 %v882
    %v884 = vand.u32 %v56, 4294901760
    %885 = vmatprep.subr.mxu0 %v884
    %v886 = vand.u32 %v55, 4294901760
    %887 = vmatpush1.msra.mxu0 %v886
    %v888 = vand.u32 %v58, 4294901760
    %889 = vmatprep.subr.mxu0 %v888
    %v890 = vand.u32 %v57, 4294901760
    %891 = vmatpush1.msra.mxu0 %v890
    %v892 = vand.u32 %v60, 4294901760
    %893 = vmatprep.subr.mxu0 %v892
    %v894 = vand.u32 %v59, 4294901760
    %895 = vmatpush1.msra.mxu0 %v894
    %v896 = vand.u32 %v62, 4294901760
    %897 = vmatprep.subr.mxu0 %v896
    %v898 = vand.u32 %v61, 4294901760
    %899 = vmatpush1.msra.mxu0 %v898
    %v900 = vand.u32 %v64, 4294901760
    %901 = vmatprep.subr.mxu0 %v900
    %v902 = vand.u32 %v63, 4294901760
    %903 = vmatpush1.msra.mxu0 %v902
    %v904 = vand.u32 %v66, 4294901760
    %905 = vmatprep.subr.mxu0 %v904
    %v906 = vand.u32 %v65, 4294901760
    %907 = vmatpush1.msra.mxu0 %v906
    %v908 = vand.u32 %v68, 4294901760
    %909 = vmatprep.subr.mxu0 %v908
    %v910 = vand.u32 %v67, 4294901760
    %911 = vmatpush1.msra.mxu0 %v910
    %v912 = vand.u32 %v70, 4294901760
    %913 = vmatprep.subr.mxu0 %v912
    %v914 = vand.u32 %v69, 4294901760
    %915 = vmatpush1.msra.mxu0 %v914
    %v916 = vand.u32 %v72, 4294901760
    %917 = vmatprep.subr.mxu0 %v916
    %v918 = vand.u32 %v71, 4294901760
    %919 = vmatpush1.msra.mxu0 %v918
    %v920 = vand.u32 %v74, 4294901760
    %921 = vmatprep.subr.mxu0 %v920
    %v922 = vand.u32 %v73, 4294901760
    %923 = vmatpush1.msra.mxu0 %v922
    %v924 = vand.u32 %v76, 4294901760
    %925 = vmatprep.subr.mxu0 %v924
    %v926 = vand.u32 %v75, 4294901760
    %927 = vmatpush1.msra.mxu0 %v926
    %v928 = vand.u32 %v78, 4294901760
    %929 = vmatprep.subr.mxu0 %v928
    %v930 = vand.u32 %v77, 4294901760
    %931 = vmatpush1.msra.mxu0 %v930
    %v932 = vand.u32 %v80, 4294901760
    %933 = vmatprep.subr.mxu0 %v932
    %v934 = vand.u32 %v79, 4294901760
    %935 = vmatpush1.msra.mxu0 %v934
    %v936 = vand.u32 %v82, 4294901760
    %937 = vmatprep.subr.mxu0 %v936
    %v938 = vand.u32 %v81, 4294901760
    %939 = vmatpush1.msra.mxu0 %v938
    %v940 = vand.u32 %v84, 4294901760
    %941 = vmatprep.subr.mxu0 %v940
    %v942 = vand.u32 %v83, 4294901760
    %943 = vmatpush1.msra.mxu0 %v942
    %v944 = vand.u32 %v86, 4294901760
    %945 = vmatprep.subr.mxu0 %v944
    %v946 = vand.u32 %v85, 4294901760
    %947 = vmatpush1.msra.mxu0 %v946
    %v948 = vand.u32 %v88, 4294901760
    %949 = vmatprep.subr.mxu0 %v948
    %v950 = vand.u32 %v87, 4294901760
    %951 = vmatpush1.msra.mxu0 %v950
    %v952 = vand.u32 %v90, 4294901760
    %953 = vmatprep.subr.mxu0 %v952
    %v954 = vand.u32 %v89, 4294901760
    %955 = vmatpush1.msra.mxu0 %v954
    %v956 = vand.u32 %v92, 4294901760
    %957 = vmatprep.subr.mxu0 %v956
    %v958 = vand.u32 %v91, 4294901760
    %959 = vmatpush1.msra.mxu0 %v958
    %v960 = vand.u32 %v94, 4294901760
    %961 = vmatprep.subr.mxu0 %v960
    %v962 = vand.u32 %v93, 4294901760
    %963 = vmatpush1.msra.mxu0 %v962
    %v964 = vand.u32 %v30, 4294901760
    %v965 = vsub.f32 %v30, %v964
    %v966 = vand.u32 %v965, 4294901760
    %967 = vmatprep.mubr.f32.mxu0 %v966
    %v968 = vand.u32 %v29, 4294901760
    %v969 = vsub.f32 %v29, %v968
    %v970 = vand.u32 %v969, 4294901760
    %971 = vmatmul.mubr.f32.gmra.mrb[0].mxu0 %v970
    %v972 = vpop.f32.mrb[0].mxu0
    %v973 = vadd.f32 %v832, %v972
    %v974 = vpop.f32.mrb[0].mxu0
    %v975 = vadd.f32 %v834, %v974
    %976 = vdwg.mxu0
    %v977 = vand.u32 %v32, 4294901760
    %v978 = vsub.f32 %v32, %v977
    %v979 = vand.u32 %v978, 4294901760
    %980 = vmatprep.subr.mxu0 %v979
    %v981 = vand.u32 %v31, 4294901760
    %v982 = vsub.f32 %v31, %v981
    %v983 = vand.u32 %v982, 4294901760
    %984 = vmatpush1.msra.mxu0 %v983
    %v985 = vand.u32 %v34, 4294901760
    %v986 = vsub.f32 %v34, %v985
    %v987 = vand.u32 %v986, 4294901760
    %988 = vmatprep.subr.mxu0 %v987
    %v989 = vand.u32 %v33, 4294901760
    %v990 = vsub.f32 %v33, %v989
    %v991 = vand.u32 %v990, 4294901760
    %992 = vmatpush1.msra.mxu0 %v991
    %v993 = vand.u32 %v36, 4294901760
    %v994 = vsub.f32 %v36, %v993
    %v995 = vand.u32 %v994, 4294901760
    %996 = vmatprep.subr.mxu0 %v995
    %v997 = vand.u32 %v35, 4294901760
    %v998 = vsub.f32 %v35, %v997
    %v999 = vand.u32 %v998, 4294901760
    %1000 = vmatpush1.msra.mxu0 %v999
    %v1001 = vand.u32 %v38, 4294901760
    %v1002 = vsub.f32 %v38, %v1001
    %v1003 = vand.u32 %v1002, 4294901760
    %1004 = vmatprep.subr.mxu0 %v1003
    %v1005 = vand.u32 %v37, 4294901760
    %v1006 = vsub.f32 %v37, %v1005
    %v1007 = vand.u32 %v1006, 4294901760
    %1008 = vmatpush1.msra.mxu0 %v1007
    %v1009 = vand.u32 %v40, 4294901760
    %v1010 = vsub.f32 %v40, %v1009
    %v1011 = vand.u32 %v1010, 4294901760
    %1012 = vmatprep.subr.mxu0 %v1011
    %v1013 = vand.u32 %v39, 4294901760
    %v1014 = vsub.f32 %v39, %v1013
    %v1015 = vand.u32 %v1014, 4294901760
    %1016 = vmatpush1.msra.mxu0 %v1015
    %v1017 = vand.u32 %v42, 4294901760
    %v1018 = vsub.f32 %v42, %v1017
    %v1019 = vand.u32 %v1018, 4294901760
    %1020 = vmatprep.subr.mxu0 %v1019
    %v1021 = vand.u32 %v41, 4294901760
    %v1022 = vsub.f32 %v41, %v1021
    %v1023 = vand.u32 %v1022, 4294901760
    %1024 = vmatpush1.msra.mxu0 %v1023
    %v1025 = vand.u32 %v44, 4294901760
    %v1026 = vsub.f32 %v44, %v1025
    %v1027 = vand.u32 %v1026, 4294901760
    %1028 = vmatprep.subr.mxu0 %v1027
    %v1029 = vand.u32 %v43, 4294901760
    %v1030 = vsub.f32 %v43, %v1029
    %v1031 = vand.u32 %v1030, 4294901760
    %1032 = vmatpush1.msra.mxu0 %v1031
    %v1033 = vand.u32 %v46, 4294901760
    %v1034 = vsub.f32 %v46, %v1033
    %v1035 = vand.u32 %v1034, 4294901760
    %1036 = vmatprep.subr.mxu0 %v1035
    %v1037 = vand.u32 %v45, 4294901760
    %v1038 = vsub.f32 %v45, %v1037
    %v1039 = vand.u32 %v1038, 4294901760
    %1040 = vmatpush1.msra.mxu0 %v1039
    %v1041 = vand.u32 %v48, 4294901760
    %v1042 = vsub.f32 %v48, %v1041
    %v1043 = vand.u32 %v1042, 4294901760
    %1044 = vmatprep.subr.mxu0 %v1043
    %v1045 = vand.u32 %v47, 4294901760
    %v1046 = vsub.f32 %v47, %v1045
    %v1047 = vand.u32 %v1046, 4294901760
    %1048 = vmatpush1.msra.mxu0 %v1047
    %v1049 = vand.u32 %v50, 4294901760
    %v1050 = vsub.f32 %v50, %v1049
    %v1051 = vand.u32 %v1050, 4294901760
    %1052 = vmatprep.subr.mxu0 %v1051
    %v1053 = vand.u32 %v49, 4294901760
    %v1054 = vsub.f32 %v49, %v1053
    %v1055 = vand.u32 %v1054, 4294901760
    %1056 = vmatpush1.msra.mxu0 %v1055
    %v1057 = vand.u32 %v52, 4294901760
    %v1058 = vsub.f32 %v52, %v1057
    %v1059 = vand.u32 %v1058, 4294901760
    %1060 = vmatprep.subr.mxu0 %v1059
    %v1061 = vand.u32 %v51, 4294901760
    %v1062 = vsub.f32 %v51, %v1061
    %v1063 = vand.u32 %v1062, 4294901760
    %1064 = vmatpush1.msra.mxu0 %v1063
    %v1065 = vand.u32 %v54, 4294901760
    %v1066 = vsub.f32 %v54, %v1065
    %v1067 = vand.u32 %v1066, 4294901760
    %1068 = vmatprep.subr.mxu0 %v1067
    %v1069 = vand.u32 %v53, 4294901760
    %v1070 = vsub.f32 %v53, %v1069
    %v1071 = vand.u32 %v1070, 4294901760
    %1072 = vmatpush1.msra.mxu0 %v1071
    %v1073 = vand.u32 %v56, 4294901760
    %v1074 = vsub.f32 %v56, %v1073
    %v1075 = vand.u32 %v1074, 4294901760
    %1076 = vmatprep.subr.mxu0 %v1075
    %v1077 = vand.u32 %v55, 4294901760
    %v1078 = vsub.f32 %v55, %v1077
    %v1079 = vand.u32 %v1078, 4294901760
    %1080 = vmatpush1.msra.mxu0 %v1079
    %v1081 = vand.u32 %v58, 4294901760
    %v1082 = vsub.f32 %v58, %v1081
    %v1083 = vand.u32 %v1082, 4294901760
    %1084 = vmatprep.subr.mxu0 %v1083
    %v1085 = vand.u32 %v57, 4294901760
    %v1086 = vsub.f32 %v57, %v1085
    %v1087 = vand.u32 %v1086, 4294901760
    %1088 = vmatpush1.msra.mxu0 %v1087
    %v1089 = vand.u32 %v60, 4294901760
    %v1090 = vsub.f32 %v60, %v1089
    %v1091 = vand.u32 %v1090, 4294901760
    %1092 = vmatprep.subr.mxu0 %v1091
    %v1093 = vand.u32 %v59, 4294901760
    %v1094 = vsub.f32 %v59, %v1093
    %v1095 = vand.u32 %v1094, 4294901760
    %1096 = vmatpush1.msra.mxu0 %v1095
    %v1097 = vand.u32 %v62, 4294901760
    %v1098 = vsub.f32 %v62, %v1097
    %v1099 = vand.u32 %v1098, 4294901760
    %1100 = vmatprep.subr.mxu0 %v1099
    %v1101 = vand.u32 %v61, 4294901760
    %v1102 = vsub.f32 %v61, %v1101
    %v1103 = vand.u32 %v1102, 4294901760
    %1104 = vmatpush1.msra.mxu0 %v1103
    %v1105 = vand.u32 %v64, 4294901760
    %v1106 = vsub.f32 %v64, %v1105
    %v1107 = vand.u32 %v1106, 4294901760
    %1108 = vmatprep.subr.mxu0 %v1107
    %v1109 = vand.u32 %v63, 4294901760
    %v1110 = vsub.f32 %v63, %v1109
    %v1111 = vand.u32 %v1110, 4294901760
    %1112 = vmatpush1.msra.mxu0 %v1111
    %v1113 = vand.u32 %v66, 4294901760
    %v1114 = vsub.f32 %v66, %v1113
    %v1115 = vand.u32 %v1114, 4294901760
    %1116 = vmatprep.subr.mxu0 %v1115
    %v1117 = vand.u32 %v65, 4294901760
    %v1118 = vsub.f32 %v65, %v1117
    %v1119 = vand.u32 %v1118, 4294901760
    %1120 = vmatpush1.msra.mxu0 %v1119
    %v1121 = vand.u32 %v68, 4294901760
    %v1122 = vsub.f32 %v68, %v1121
    %v1123 = vand.u32 %v1122, 4294901760
    %1124 = vmatprep.subr.mxu0 %v1123
    %v1125 = vand.u32 %v67, 4294901760
    %v1126 = vsub.f32 %v67, %v1125
    %v1127 = vand.u32 %v1126, 4294901760
    %1128 = vmatpush1.msra.mxu0 %v1127
    %v1129 = vand.u32 %v70, 4294901760
    %v1130 = vsub.f32 %v70, %v1129
    %v1131 = vand.u32 %v1130, 4294901760
    %1132 = vmatprep.subr.mxu0 %v1131
    %v1133 = vand.u32 %v69, 4294901760
    %v1134 = vsub.f32 %v69, %v1133
    %v1135 = vand.u32 %v1134, 4294901760
    %1136 = vmatpush1.msra.mxu0 %v1135
    %v1137 = vand.u32 %v72, 4294901760
    %v1138 = vsub.f32 %v72, %v1137
    %v1139 = vand.u32 %v1138, 4294901760
    %1140 = vmatprep.subr.mxu0 %v1139
    %v1141 = vand.u32 %v71, 4294901760
    %v1142 = vsub.f32 %v71, %v1141
    %v1143 = vand.u32 %v1142, 4294901760
    %1144 = vmatpush1.msra.mxu0 %v1143
    %v1145 = vand.u32 %v74, 4294901760
    %v1146 = vsub.f32 %v74, %v1145
    %v1147 = vand.u32 %v1146, 4294901760
    %1148 = vmatprep.subr.mxu0 %v1147
    %v1149 = vand.u32 %v73, 4294901760
    %v1150 = vsub.f32 %v73, %v1149
    %v1151 = vand.u32 %v1150, 4294901760
    %1152 = vmatpush1.msra.mxu0 %v1151
    %v1153 = vand.u32 %v76, 4294901760
    %v1154 = vsub.f32 %v76, %v1153
    %v1155 = vand.u32 %v1154, 4294901760
    %1156 = vmatprep.subr.mxu0 %v1155
    %v1157 = vand.u32 %v75, 4294901760
    %v1158 = vsub.f32 %v75, %v1157
    %v1159 = vand.u32 %v1158, 4294901760
    %1160 = vmatpush1.msra.mxu0 %v1159
    %v1161 = vand.u32 %v78, 4294901760
    %v1162 = vsub.f32 %v78, %v1161
    %v1163 = vand.u32 %v1162, 4294901760
    %1164 = vmatprep.subr.mxu0 %v1163
    %v1165 = vand.u32 %v77, 4294901760
    %v1166 = vsub.f32 %v77, %v1165
    %v1167 = vand.u32 %v1166, 4294901760
    %1168 = vmatpush1.msra.mxu0 %v1167
    %v1169 = vand.u32 %v80, 4294901760
    %v1170 = vsub.f32 %v80, %v1169
    %v1171 = vand.u32 %v1170, 4294901760
    %1172 = vmatprep.subr.mxu0 %v1171
    %v1173 = vand.u32 %v79, 4294901760
    %v1174 = vsub.f32 %v79, %v1173
    %v1175 = vand.u32 %v1174, 4294901760
    %1176 = vmatpush1.msra.mxu0 %v1175
    %v1177 = vand.u32 %v82, 4294901760
    %v1178 = vsub.f32 %v82, %v1177
    %v1179 = vand.u32 %v1178, 4294901760
    %1180 = vmatprep.subr.mxu0 %v1179
    %v1181 = vand.u32 %v81, 4294901760
    %v1182 = vsub.f32 %v81, %v1181
    %v1183 = vand.u32 %v1182, 4294901760
    %1184 = vmatpush1.msra.mxu0 %v1183
    %v1185 = vand.u32 %v84, 4294901760
    %v1186 = vsub.f32 %v84, %v1185
    %v1187 = vand.u32 %v1186, 4294901760
    %1188 = vmatprep.subr.mxu0 %v1187
    %v1189 = vand.u32 %v83, 4294901760
    %v1190 = vsub.f32 %v83, %v1189
    %v1191 = vand.u32 %v1190, 4294901760
    %1192 = vmatpush1.msra.mxu0 %v1191
    %v1193 = vand.u32 %v86, 4294901760
    %v1194 = vsub.f32 %v86, %v1193
    %v1195 = vand.u32 %v1194, 4294901760
    %1196 = vmatprep.subr.mxu0 %v1195
    %v1197 = vand.u32 %v85, 4294901760
    %v1198 = vsub.f32 %v85, %v1197
    %v1199 = vand.u32 %v1198, 4294901760
    %1200 = vmatpush1.msra.mxu0 %v1199
    %v1201 = vand.u32 %v88, 4294901760
    %v1202 = vsub.f32 %v88, %v1201
    %v1203 = vand.u32 %v1202, 4294901760
    %1204 = vmatprep.subr.mxu0 %v1203
    %v1205 = vand.u32 %v87, 4294901760
    %v1206 = vsub.f32 %v87, %v1205
    %v1207 = vand.u32 %v1206, 4294901760
    %1208 = vmatpush1.msra.mxu0 %v1207
    %v1209 = vand.u32 %v90, 4294901760
    %v1210 = vsub.f32 %v90, %v1209
    %v1211 = vand.u32 %v1210, 4294901760
    %1212 = vmatprep.subr.mxu0 %v1211
    %v1213 = vand.u32 %v89, 4294901760
    %v1214 = vsub.f32 %v89, %v1213
    %v1215 = vand.u32 %v1214, 4294901760
    %1216 = vmatpush1.msra.mxu0 %v1215
    %v1217 = vand.u32 %v92, 4294901760
    %v1218 = vsub.f32 %v92, %v1217
    %v1219 = vand.u32 %v1218, 4294901760
    %1220 = vmatprep.subr.mxu0 %v1219
    %v1221 = vand.u32 %v91, 4294901760
    %v1222 = vsub.f32 %v91, %v1221
    %v1223 = vand.u32 %v1222, 4294901760
    %1224 = vmatpush1.msra.mxu0 %v1223
    %v1225 = vand.u32 %v94, 4294901760
    %v1226 = vsub.f32 %v94, %v1225
    %v1227 = vand.u32 %v1226, 4294901760
    %1228 = vmatprep.subr.mxu0 %v1227
    %v1229 = vand.u32 %v93, 4294901760
    %v1230 = vsub.f32 %v93, %v1229
    %v1231 = vand.u32 %v1230, 4294901760
    %1232 = vmatpush1.msra.mxu0 %v1231
    %v1233 = vand.u32 %v30, 4294901760
    %1234 = vmatprep.mubr.f32.mxu0 %v1233
    %v1235 = vand.u32 %v29, 4294901760
    %1236 = vmatmul.mubr.f32.gmra.mrb[0].mxu0 %v1235
    %v1237 = vpop.f32.mrb[0].mxu0
    %v1238 = vadd.f32 %v973, %v1237
    %v1239 = vpop.f32.mrb[0].mxu0
    %v1240 = vadd.f32 %v975, %v1239
    %1241 = vdwg.mxu0
    %v1242 = vand.u32 %v32, 4294901760
    %1243 = vmatprep.subr.mxu0 %v1242
    %v1244 = vand.u32 %v31, 4294901760
    %1245 = vmatpush1.msra.mxu0 %v1244
    %v1246 = vand.u32 %v34, 4294901760
    %1247 = vmatprep.subr.mxu0 %v1246
    %v1248 = vand.u32 %v33, 4294901760
    %1249 = vmatpush1.msra.mxu0 %v1248
    %v1250 = vand.u32 %v36, 4294901760
    %1251 = vmatprep.subr.mxu0 %v1250
    %v1252 = vand.u32 %v35, 4294901760
    %1253 = vmatpush1.msra.mxu0 %v1252
    %v1254 = vand.u32 %v38, 4294901760
    %1255 = vmatprep.subr.mxu0 %v1254
    %v1256 = vand.u32 %v37, 4294901760
    %1257 = vmatpush1.msra.mxu0 %v1256
    %v1258 = vand.u32 %v40, 4294901760
    %1259 = vmatprep.subr.mxu0 %v1258
    %v1260 = vand.u32 %v39, 4294901760
    %1261 = vmatpush1.msra.mxu0 %v1260
    %v1262 = vand.u32 %v42, 4294901760
    %1263 = vmatprep.subr.mxu0 %v1262
    %v1264 = vand.u32 %v41, 4294901760
    %1265 = vmatpush1.msra.mxu0 %v1264
    %v1266 = vand.u32 %v44, 4294901760
    %1267 = vmatprep.subr.mxu0 %v1266
    %v1268 = vand.u32 %v43, 4294901760
    %1269 = vmatpush1.msra.mxu0 %v1268
    %v1270 = vand.u32 %v46, 4294901760
    %1271 = vmatprep.subr.mxu0 %v1270
    %v1272 = vand.u32 %v45, 4294901760
    %1273 = vmatpush1.msra.mxu0 %v1272
    %v1274 = vand.u32 %v48, 4294901760
    %1275 = vmatprep.subr.mxu0 %v1274
    %v1276 = vand.u32 %v47, 4294901760
    %1277 = vmatpush1.msra.mxu0 %v1276
    %v1278 = vand.u32 %v50, 4294901760
    %1279 = vmatprep.subr.mxu0 %v1278
    %v1280 = vand.u32 %v49, 4294901760
    %1281 = vmatpush1.msra.mxu0 %v1280
    %v1282 = vand.u32 %v52, 4294901760
    %1283 = vmatprep.subr.mxu0 %v1282
    %v1284 = vand.u32 %v51, 4294901760
    %1285 = vmatpush1.msra.mxu0 %v1284
    %v1286 = vand.u32 %v54, 4294901760
    %1287 = vmatprep.subr.mxu0 %v1286
    %v1288 = vand.u32 %v53, 4294901760
    %1289 = vmatpush1.msra.mxu0 %v1288
    %v1290 = vand.u32 %v56, 4294901760
    %1291 = vmatprep.subr.mxu0 %v1290
    %v1292 = vand.u32 %v55, 4294901760
    %1293 = vmatpush1.msra.mxu0 %v1292
    %v1294 = vand.u32 %v58, 4294901760
    %1295 = vmatprep.subr.mxu0 %v1294
    %v1296 = vand.u32 %v57, 4294901760
    %1297 = vmatpush1.msra.mxu0 %v1296
    %v1298 = vand.u32 %v60, 4294901760
    %1299 = vmatprep.subr.mxu0 %v1298
    %v1300 = vand.u32 %v59, 4294901760
    %1301 = vmatpush1.msra.mxu0 %v1300
    %v1302 = vand.u32 %v62, 4294901760
    %1303 = vmatprep.subr.mxu0 %v1302
    %v1304 = vand.u32 %v61, 4294901760
    %1305 = vmatpush1.msra.mxu0 %v1304
    %v1306 = vand.u32 %v64, 4294901760
    %1307 = vmatprep.subr.mxu0 %v1306
    %v1308 = vand.u32 %v63, 4294901760
    %1309 = vmatpush1.msra.mxu0 %v1308
    %v1310 = vand.u32 %v66, 4294901760
    %1311 = vmatprep.subr.mxu0 %v1310
    %v1312 = vand.u32 %v65, 4294901760
    %1313 = vmatpush1.msra.mxu0 %v1312
    %v1314 = vand.u32 %v68, 4294901760
    %1315 = vmatprep.subr.mxu0 %v1314
    %v1316 = vand.u32 %v67, 4294901760
    %1317 = vmatpush1.msra.mxu0 %v1316
    %v1318 = vand.u32 %v70, 4294901760
    %1319 = vmatprep.subr.mxu0 %v1318
    %v1320 = vand.u32 %v69, 4294901760
    %1321 = vmatpush1.msra.mxu0 %v1320
    %v1322 = vand.u32 %v72, 4294901760
    %1323 = vmatprep.subr.mxu0 %v1322
    %v1324 = vand.u32 %v71, 4294901760
    %1325 = vmatpush1.msra.mxu0 %v1324
    %v1326 = vand.u32 %v74, 4294901760
    %1327 = vmatprep.subr.mxu0 %v1326
    %v1328 = vand.u32 %v73, 4294901760
    %1329 = vmatpush1.msra.mxu0 %v1328
    %v1330 = vand.u32 %v76, 4294901760
    %1331 = vmatprep.subr.mxu0 %v1330
    %v1332 = vand.u32 %v75, 4294901760
    %1333 = vmatpush1.msra.mxu0 %v1332
    %v1334 = vand.u32 %v78, 4294901760
    %1335 = vmatprep.subr.mxu0 %v1334
    %v1336 = vand.u32 %v77, 4294901760
    %1337 = vmatpush1.msra.mxu0 %v1336
    %v1338 = vand.u32 %v80, 4294901760
    %1339 = vmatprep.subr.mxu0 %v1338
    %v1340 = vand.u32 %v79, 4294901760
    %1341 = vmatpush1.msra.mxu0 %v1340
    %v1342 = vand.u32 %v82, 4294901760
    %1343 = vmatprep.subr.mxu0 %v1342
    %v1344 = vand.u32 %v81, 4294901760
    %1345 = vmatpush1.msra.mxu0 %v1344
    %v1346 = vand.u32 %v84, 4294901760
    %1347 = vmatprep.subr.mxu0 %v1346
    %v1348 = vand.u32 %v83, 4294901760
    %1349 = vmatpush1.msra.mxu0 %v1348
    %v1350 = vand.u32 %v86, 4294901760
    %1351 = vmatprep.subr.mxu0 %v1350
    %v1352 = vand.u32 %v85, 4294901760
    %1353 = vmatpush1.msra.mxu0 %v1352
    %v1354 = vand.u32 %v88, 4294901760
    %1355 = vmatprep.subr.mxu0 %v1354
    %v1356 = vand.u32 %v87, 4294901760
    %1357 = vmatpush1.msra.mxu0 %v1356
    %v1358 = vand.u32 %v90, 4294901760
    %1359 = vmatprep.subr.mxu0 %v1358
    %v1360 = vand.u32 %v89, 4294901760
    %1361 = vmatpush1.msra.mxu0 %v1360
    %v1362 = vand.u32 %v92, 4294901760
    %1363 = vmatprep.subr.mxu0 %v1362
    %v1364 = vand.u32 %v91, 4294901760
    %1365 = vmatpush1.msra.mxu0 %v1364
    %v1366 = vand.u32 %v94, 4294901760
    %1367 = vmatprep.subr.mxu0 %v1366
    %v1368 = vand.u32 %v93, 4294901760
    %1369 = vmatpush1.msra.mxu0 %v1368
    %v1370 = vand.u32 %v30, 4294901760
    %1371 = vmatprep.mubr.f32.mxu0 %v1370
    %v1372 = vand.u32 %v29, 4294901760
    %1373 = vmatmul.mubr.f32.gmra.mrb[0].mxu0 %v1372
    %v1374 = vpop.f32.mrb[0].mxu0
    %v1375 = vadd.f32 %v1238, %v1374
    %v1376 = vpop.f32.mrb[0].mxu0
    %v1377 = vadd.f32 %v1240, %v1376
    %1378 = vdwg.mxu0
    %vm1379 = vcmask 130048
    %1380 = vst.msk [vmem:[%s2] sm:$0xff] %vm1379, %v1375
    %1382 = vrot.lane.b32.xlu0 %v1375, 112
    %v1383 = vpop.permute.xlu0 %1382
    %vm1385 = vcmask 203776
    %1386 = vst.msk [vmem:[%s3] sm:$0xff] %vm1385, %v1383
    %1387 = vrot.lane.b32.xlu0 %v1375, 87
    %v1388 = vpop.permute.xlu0 %1387
    %vm1390 = vcmask 400384
    %1391 = vst.msk [vmem:[%s4] sm:$0xff] %vm1390, %v1388
    %1393 = vrot.lane.b32.xlu0 %v1375, 38
    %v1394 = vpop.permute.xlu0 %1393
    %1395 = vrot.lane.b32.xlu0 %v1377, 38
    %v1396 = vpop.permute.xlu0 %1395
    %vm1397 = vcmask 310272
    %v1398 = vsel %vm1397, %v1394, %v1396
    %vm1400 = vcmask 990208
    %1401 = vst.msk [vmem:[%s5] sm:$0xff] %vm1400, %v1398
    // Predicated region
    $region14: #{avg_pools.1} parent=1 // pred_check
      _
    $region15: #{avg_pools.1} parent=1 // pred_check_branch
      %1403 = sbr.rel (0) target = $region17
    $region16: #{avg_pools.1} parent=1 // pred_region
      _
    $region17: #{avg_pools.1} parent=1 // pred_fallthru
      _
    // Predicated region
    $region18: #{avg_pools.1} parent=1 // pred_check
      _
    $region19: #{avg_pools.1} parent=1 // pred_check_branch
      %1405 = sbr.rel (0) target = $region21
    $region20: #{avg_pools.1} parent=1 // pred_region
      _
    $region21: #{avg_pools.1} parent=1 // pred_fallthru
      _
    // Predicated region
    $region22: #{avg_pools.1} parent=1 // pred_check
      _
    $region23: #{avg_pools.1} parent=1 // pred_check_branch
      %1407 = sbr.rel (0) target = $region25
    $region24: #{avg_pools.1} parent=1 // pred_region
      _
    $region25: #{avg_pools.1} parent=1 // pred_fallthru
      _
    // Predicated region
    $region26: #{avg_pools.1} parent=1 // pred_check
      _
    $region27: #{avg_pools.1} parent=1 // pred_check_branch
      %1409 = sbr.rel (0) target = $region29
    $region28: #{avg_pools.1} parent=1 // pred_region
      _
    $region29: #{avg_pools.1} parent=1 // pred_fallthru
      _
    // Predicated region
    $region30: #{avg_pools.1} parent=1 // pred_check
      _
    $region31: #{avg_pools.1} parent=1 // pred_check_branch
      %1411 = sbr.rel (0) target = $region33
    $region32: #{avg_pools.1} parent=1 // pred_region
      _
    $region33: #{avg_pools.1} parent=1 // pred_fallthru
      _
    // Predicated region
    $region34: #{avg_pools.1} parent=1 // pred_check
      _
    $region35: #{avg_pools.1} parent=1 // pred_check_branch
      %1413 = sbr.rel (0) target = $region37
    $region36: #{avg_pools.1} parent=1 // pred_region
      _
    $region37: #{avg_pools.1} parent=1 // pred_fallthru
      _
    // Predicated region
    $region38: #{avg_pools.1} parent=1 // pred_check
      _
    $region39: #{avg_pools.1} parent=1 // pred_check_branch
      %1415 = sbr.rel (0) target = $region41
    $region40: #{avg_pools.1} parent=1 // pred_region
      _
    $region41: #{avg_pools.1} parent=1 // pred_fallthru
      _
    // Predicated region
    $region42: #{avg_pools.1} parent=1 // pred_check
      _
    $region43: #{avg_pools.1} parent=1 // pred_check_branch
      %1417 = sbr.rel (0) target = $region45
    $region44: #{avg_pools.1} parent=1 // pred_region
      _
    $region45: #{avg_pools.1} parent=1 // pred_fallthru
      _
    %1418 = vsyncpa [#allocation3], 1

</llo_original>
